<compile_context>
chip_gen: v7x
topology: tpu7x:2x2x1
jax: 0.10.0
libtpu: 0.0.40
codegen_flags: <defaults>
</compile_context>

<pallas_src>
import math
import numpy as np
import jax
import jax.numpy as jnp
from jax.experimental import pallas as pl
from jax.experimental.pallas import tpu as pltpu

# ----------------------------- config (cfg['data']) --------------------------
SAMPLE_RATE = 2000          # data['sample_rate']
N_FFT = 64                  # data['nfft']
HOP = 32                    # data['hoplen']
WINDOW = "hann"             # data['window']
N_MELS = 16                 # data['n_mels']
N_FREQS = N_FFT // 2 + 1    # onesided freq bins (= 33)
AMIN = 1e-10
REF = 1.0
TOP_DB = None               # top_db=None -> no clipping
FMIN = 20.0
FMAX = SAMPLE_RATE / 2.0

LANES = 128                 # lane-dense working width for the fused spectrum
IM_OFF = 64                 # lane offset where the imaginary spectrum lives
assert N_FREQS <= IM_OFF and IM_OFF + N_FREQS <= LANES


# ----------------------- deterministic parameter setup -----------------------
def _hz_to_mel(f):
    # Slaney mel scale (librosa htk=False)
    f = np.asarray(f, dtype=np.float64)
    f_sp = 200.0 / 3.0
    mels = f / f_sp
    min_log_hz = 1000.0
    min_log_mel = min_log_hz / f_sp
    logstep = math.log(6.4) / 27.0
    return np.where(f >= min_log_hz,
                    min_log_mel + np.log(np.maximum(f, 1e-12) / min_log_hz) / logstep,
                    mels)


def _mel_to_hz(m):
    m = np.asarray(m, dtype=np.float64)
    f_sp = 200.0 / 3.0
    freqs = f_sp * m
    min_log_hz = 1000.0
    min_log_mel = min_log_hz / f_sp
    logstep = math.log(6.4) / 27.0
    return np.where(m >= min_log_mel,
                    min_log_hz * np.exp(logstep * (m - min_log_mel)),
                    freqs)


def mel_filterbank(sr, n_fft, n_mels, fmin, fmax):
    """librosa-style slaney-normed mel filterbank, shape (n_freqs, n_mels)."""
    n_freqs = n_fft // 2 + 1
    fftfreqs = np.linspace(0.0, sr / 2.0, n_freqs)
    mel_f = _mel_to_hz(np.linspace(_hz_to_mel(fmin), _hz_to_mel(fmax), n_mels + 2))
    fdiff = np.diff(mel_f)
    ramps = mel_f[:, None] - fftfreqs[None, :]
    lower = -ramps[:-2] / fdiff[:-1, None]
    upper = ramps[2:] / fdiff[1:, None]
    weights = np.maximum(0.0, np.minimum(lower, upper))
    enorm = 2.0 / (mel_f[2:n_mels + 2] - mel_f[:n_mels])
    weights = weights * enorm[:, None]             # (n_mels, n_freqs)
    return weights.T.astype(np.float32)            # (n_freqs, n_mels)


def dft_kernels(n_fft):
    """Windowed real/imag DFT matrices, shape (n_fft, n_freqs)."""
    n_freqs = n_fft // 2 + 1
    n = np.arange(n_fft, dtype=np.float64)
    k = np.arange(n_freqs, dtype=np.float64)
    ang = 2.0 * np.pi * np.outer(n, k) / n_fft
    # periodic ('fftbins=True') hann window, as used by scipy.signal.get_window
    win = 0.5 - 0.5 * np.cos(2.0 * np.pi * n / n_fft)
    w_real = (win[:, None] * np.cos(ang)).astype(np.float32)
    w_imag = (-win[:, None] * np.sin(ang)).astype(np.float32)
    return w_real, w_imag


def fused_dft_weight(n_fft):
    """(n_fft, 128) weight: real DFT in lanes [0,N_FREQS), imag in [64,64+N_FREQS)."""
    w_real, w_imag = dft_kernels(n_fft)
    w = np.zeros((n_fft, LANES), dtype=np.float32)
    w[:, :N_FREQS] = w_real
    w[:, IM_OFF:IM_OFF + N_FREQS] = w_imag
    return w


def fused_mel_weight():
    """(128, n_mels) mel weight; mel rows duplicated at lane offset 64 so a
    single matmul over the squared fused spectrum sums re^2 + im^2."""
    melW = mel_filterbank(SAMPLE_RATE, N_FFT, N_MELS, FMIN, FMAX)  # (N_FREQS, N_MELS)
    m = np.zeros((LANES, N_MELS), dtype=np.float32)
    m[:N_FREQS, :] = melW
    m[IM_OFF:IM_OFF + N_FREQS, :] = melW
    return m


# --------------------------------- kernel ------------------------------------
_LOG_OFFSET = 10.0 * math.log10(max(AMIN, REF))  # = 0.0 for ref=1.0


def logmel_kernel(frames_ref, wdft_ref, mel_ref, out_ref):
    f = frames_ref[...]                                                   # (bm, n_fft)
    # One lane-dense MXU push: lanes [0,33) = Re(X), lanes [64,97) = Im(X).
    reim = jnp.dot(f, wdft_ref[...], preferred_element_type=jnp.float32)  # (bm, 128)
    power = reim * reim                                                   # VPU, full vregs
    # Mel weight has melW at rows [0,33) AND rows [64,97): this matmul computes
    # sum_k melW[k,:] * (re_k^2 + im_k^2) in a single pass (no roll needed).
    mel = jnp.dot(power, mel_ref[...], preferred_element_type=jnp.float32)  # (bm, n_mels)
    logmel = 10.0 * jnp.log10(jnp.maximum(mel, AMIN)) - _LOG_OFFSET
    # top_db is None -> no clipping.
    out_ref[...] = logmel


# -------------------------------- wrapper ------------------------------------
def _round_up(x, m):
    return ((x + m - 1) // m) * m


def _choose_block_m(M, target=1024):
    """Large row tiles (amortize ~0.35us per grid step) but keep the grid length
    >= 2 so a v7x megacore can shard the single 'parallel' axis across both
    TensorCores.  Always a multiple of 8 (sublane granularity)."""
    if M <= 8:
        return 8
    bm = min(target, _round_up((M + 1) // 2, 8))
    return max(8, bm)


def _frame_signal(xpad, T):
    """(B, C, Lp) padded signal -> (B, C, T, N_FFT) frames with hop HOP."""
    B, C, Lp = xpad.shape
    if N_FFT == 2 * HOP:
        # Slice+reshape+concat instead of a gather (n_fft is exactly 2 hops).
        need = (T + 1) * HOP
        chunks = xpad[:, :, :need].reshape(B, C, T + 1, HOP)
        return jnp.concatenate([chunks[:, :, :T, :], chunks[:, :, 1:T + 1, :]], axis=-1)
    idx = (jnp.arange(T) * HOP)[:, None] + jnp.arange(N_FFT)[None, :]     # (T, n_fft)
    return xpad[:, :, idx]


def logmel_extractor(x):
    """x: (batch, channels, data_length) f32 -> (batch, channels, time, n_mels)."""
    if x.ndim != 3:
        raise ValueError(f"x shape must be (batch, channels, data_length), got {x.shape}")
    B, C, L = x.shape
    x = x.astype(jnp.float32)

    # center=True, pad_mode='reflect'
    pad = N_FFT // 2
    xpad = jnp.pad(x, ((0, 0), (0, 0), (pad, pad)), mode="reflect")
    T = L // HOP + 1
    frames = _frame_signal(xpad, T)                                      # (B, C, T, n_fft)

    M = B * C * T
    frames = frames.reshape(M, N_FFT)
    block_m = _choose_block_m(M)
    M_pad = _round_up(M, block_m)
    if M_pad > M:
        frames = jnp.pad(frames, ((0, M_pad - M), (0, 0)))

    wdft = jnp.asarray(fused_dft_weight(N_FFT))      # (n_fft, 128)
    melW = jnp.asarray(fused_mel_weight())           # (128, n_mels)

    grid = (M_pad // block_m,)
    cost = pl.CostEstimate(
        flops=2 * M_pad * (N_FFT * LANES + LANES * N_MELS),
        transcendentals=M_pad * N_MELS,
        bytes_accessed=4 * (M_pad * N_FFT + M_pad * N_MELS
                            + N_FFT * LANES + LANES * N_MELS),
    )

    out = pl.pallas_call(
        logmel_kernel,
        out_shape=jax.ShapeDtypeStruct((M_pad, N_MELS), jnp.float32),
        grid_spec=pltpu.PrefetchScalarGridSpec(
            num_scalar_prefetch=0,
            grid=grid,
            in_specs=[
                pl.BlockSpec((block_m, N_FFT), lambda i: (i, 0)),
                pl.BlockSpec((N_FFT, LANES), lambda i: (0, 0)),    # grid-invariant
                pl.BlockSpec((LANES, N_MELS), lambda i: (0, 0)),   # grid-invariant
            ],
            out_specs=pl.BlockSpec((block_m, N_MELS), lambda i: (i, 0)),
        ),
        compiler_params=pltpu.CompilerParams(dimension_semantics=("parallel",)),
        cost_estimate=cost,
    )(frames, wdft, melW)

    return out[:M].reshape(B, C, T, N_MELS)


# ------------------------------- reference -----------------------------------
def logmel_reference(x):
    """Pure-JAX reference (matches torchlibrosa semantics); uses the gather
    framing path so it independently cross-checks the wrapper's framing."""
    B, C, L = x.shape
    pad = N_FFT // 2
    xpad = jnp.pad(x.astype(jnp.float32), ((0, 0), (0, 0), (pad, pad)), mode="reflect")
    T = L // HOP + 1
    idx = (jnp.arange(T) * HOP)[:, None] + jnp.arange(N_FFT)[None, :]
    frames = xpad[:, :, idx]                                             # (B, C, T, n_fft)
    w_real, w_imag = dft_kernels(N_FFT)
    re = frames @ jnp.asarray(w_real)
    im = frames @ jnp.asarray(w_imag)
    power = re * re + im * im
    mel = power @ jnp.asarray(mel_filterbank(SAMPLE_RATE, N_FFT, N_MELS, FMIN, FMAX))
    return 10.0 * jnp.log10(jnp.maximum(mel, AMIN)) - _LOG_OFFSET


# --------------------------------- main --------------------------------------
if __name__ == "__main__":
    key = jax.random.PRNGKey(0)
    B, C, L = 2, 4, 256                                   # (batch, channels=4, data_length)
    x = jax.random.normal(key, (B, C, L), dtype=jnp.float32)

    out = logmel_extractor(x)
    out = jax.block_until_ready(out)

    ref = jax.block_until_ready(logmel_reference(x))
    assert out.shape == (B, C, L // HOP + 1, N_MELS), out.shape
    np.testing.assert_allclose(np.asarray(out), np.asarray(ref), rtol=1e-4, atol=1e-4)

    print("KERNEL_OK")
</pallas_src>

<mosaic_0001>
module attributes {stable_mosaic.version = 11 : i64} {
  func.func @logmel_kernel(%arg0: i32, %arg1: memref<40x64xf32, #tpu.memory_space<vmem>>, %arg2: memref<64x128xf32, #tpu.memory_space<vmem>>, %arg3: memref<128x16xf32, #tpu.memory_space<vmem>>, %arg4: memref<40x16xf32, #tpu.memory_space<vmem>>) attributes {dimension_semantics = [#tpu.dimension_semantics<parallel>], iteration_bounds = array<i64: 2>, scalar_prefetch = 0 : i64, scratch_operands = 0 : i64, tpu.core_type = #tpu.core_type<tc>, window_params = [{transform_indices = @transform_0, window_bounds = array<i64: 40, 64>}, {pipeline_mode = #tpu.pipeline_mode<synchronous>, transform_indices = @transform_1, window_bounds = array<i64: 64, 128>}, {pipeline_mode = #tpu.pipeline_mode<synchronous>, transform_indices = @transform_2, window_bounds = array<i64: 128, 16>}, {transform_indices = @transform_3, window_bounds = array<i64: 40, 16>}]} {
    %c0 = arith.constant 0 : index
    %c0_0 = arith.constant 0 : index
    %0 = vector.load %arg1[%c0, %c0_0] : memref<40x64xf32, #tpu.memory_space<vmem>>, vector<40x64xf32>
    %c0_1 = arith.constant 0 : index
    %c0_2 = arith.constant 0 : index
    %1 = vector.load %arg2[%c0_1, %c0_2] : memref<64x128xf32, #tpu.memory_space<vmem>>, vector<64x128xf32>
    %cst = arith.constant dense<0.000000e+00> : vector<40x128xf32>
    %2 = tpu.matmul %0, %1, %cst {dimension_numbers = #tpu.dot_dimension_numbers<[1], [0], [0], [1], [0, 0, 1, 1], [], []>} : vector<40x64xf32>, vector<64x128xf32>, vector<40x128xf32> -> vector<40x128xf32>
    %3 = arith.mulf %2, %2 : vector<40x128xf32>
    %c0_3 = arith.constant 0 : index
    %c0_4 = arith.constant 0 : index
    %4 = vector.load %arg3[%c0_3, %c0_4] : memref<128x16xf32, #tpu.memory_space<vmem>>, vector<128x16xf32>
    %cst_5 = arith.constant dense<0.000000e+00> : vector<40x16xf32>
    %5 = tpu.matmul %3, %4, %cst_5 {dimension_numbers = #tpu.dot_dimension_numbers<[1], [0], [0], [1], [0, 0, 1, 1], [], []>} : vector<40x128xf32>, vector<128x16xf32>, vector<40x16xf32> -> vector<40x16xf32>
    %cst_6 = arith.constant 1.000000e-10 : f32
    %6 = vector.broadcast %cst_6 : f32 to vector<40x16xf32>
    %7 = arith.maximumf %5, %6 : vector<40x16xf32>
    %8 = math.log %7 : vector<40x16xf32>
    %cst_7 = arith.constant 0.434294492 : f32
    %9 = vector.broadcast %cst_7 : f32 to vector<40x16xf32>
    %10 = arith.mulf %8, %9 : vector<40x16xf32>
    %cst_8 = arith.constant 1.000000e+01 : f32
    %11 = vector.broadcast %cst_8 : f32 to vector<40x16xf32>
    %12 = arith.mulf %11, %10 : vector<40x16xf32>
    %cst_9 = arith.constant 0.000000e+00 : f32
    %13 = vector.broadcast %cst_9 : f32 to vector<40x16xf32>
    %14 = arith.subf %12, %13 : vector<40x16xf32>
    %c0_10 = arith.constant 0 : index
    %c0_11 = arith.constant 0 : index
    %15 = vector.load %arg4[%c0_10, %c0_11] : memref<40x16xf32, #tpu.memory_space<vmem>>, vector<40x16xf32>
    tpu.vector_store %arg4[%c0_10, %c0_11], %14 {strides = array<i32>} : memref<40x16xf32, #tpu.memory_space<vmem>>, vector<40x16xf32>,
    return
  }
  func.func @transform_0(%arg0: i32) -> (i32, i32) {
    %c0_i32 = arith.constant 0 : i32
    %c0_i32_0 = arith.constant 0 : i32
    return %arg0, %c0_i32 : i32, i32
  }
  func.func @transform_1(%arg0: i32) -> (i32, i32) {
    %c0_i32 = arith.constant 0 : i32
    %c0_i32_0 = arith.constant 0 : i32
    %c0_i32_1 = arith.constant 0 : i32
    return %c0_i32, %c0_i32_0 : i32, i32
  }
  func.func @transform_2(%arg0: i32) -> (i32, i32) {
    %c0_i32 = arith.constant 0 : i32
    %c0_i32_0 = arith.constant 0 : i32
    %c0_i32_1 = arith.constant 0 : i32
    return %c0_i32, %c0_i32_0 : i32, i32
  }
  func.func @transform_3(%arg0: i32) -> (i32, i32) {
    %c0_i32 = arith.constant 0 : i32
    %c0_i32_0 = arith.constant 0 : i32
    return %arg0, %c0_i32 : i32, i32
  }
}

</mosaic_0001>

<llo_original>
// kernel: tpu_custom_call.1
$region0: #{tpu_custom_call.1}
  #allocation0 [shape = 'u32[]', space=smem, size = 0x4, offset = 0x4, fixed_abs, tag = 'smem constant byte address 0x4 - core index']
  #allocation1 [shape = 'u32[144,128]{1,0:T(1,128)}', space=vmem, size = 0x12000, scoped, tag = 'internal scratch']
  %s0 = inlined_call_operand.vmem [shape: f32[80,64], index: 0, kind: input, shape index: {}]
  %s1 = inlined_call_operand.vmem [shape: f32[64,128], index: 1, kind: input, shape index: {}]
  %s2 = inlined_call_operand.vmem [shape: f32[128,16], index: 2, kind: input, shape index: {}]
  %s3 = inlined_call_operand.vmem [shape: f32[80,16], index: 3, kind: output, shape index: {}]
  %s4 = sld [smem:[#allocation0]]
  $region45: #{tpu_custom_call.1} parent=0
    _
  %s6 = ssub.s32 1, %s4
  %s7 = scalar_select 0, %s6, %s4
  loop: start=0, step=1, limit=4
  $region2: #{tpu_custom_call.1} parent=0 // loop_pre_header
    _
  $region3: #{tpu_custom_call.1} parent=0 // loop_header
    %s9 = sphi 0, %s13
    %p10 = scmp.ge.s32.totalorder %s9, 4
    %s19 = sphi 0, %s21
    %s22 = sphi 0, %s19
    %s23 = sphi 0, %s22
    %s39 = sphi 0, %s23
    %s43 = sphi 0, %s43
    %s45 = sphi 0, %s43
    %s46 = sphi 0, %s45
    %s60 = sphi 0, %s46
    %s64 = sphi 0, %s64
    %s66 = sphi 0, %s64
    %s67 = sphi 0, %s66
    %s81 = sphi 0, %s67
    %s87 = sphi 0, %s89
    %s90 = sphi 0, %s87
    %s91 = sphi 0, %s90
    %s107 = sphi 0, %s91
  $region4: #{tpu_custom_call.1} parent=0 // loop_header_branch
    %12 = sbr.rel (%p10) target = $region8
  $region5: #{tpu_custom_call.1} parent=0 // loop_body
    %s14 = ssub.s32 %s9, 1
    %s15 = ssub.s32 %s9, 2
    %s16 = sadd.s32 %s9, 1
    %s17 = ssub.s32 %s9, %s16
    %p18 = scmp.eq.s32.totalorder %s17, 0
    %s20 = sadd.s32 %s19, 1
    %s21 = scalar_select %p18, %s19, %s20
    %p24 = pneg %p18
    %p25 = scmp.eq.s32.totalorder %s9, 1
    %p26 = por %p24, %p25
    %p27 = scmp.ne.s32.totalorder %s19, %s22
    %p28 = scmp.eq.s32.totalorder %s9, 0
    %p29 = por %p27, %p28
    %p30 = scmp.ne.s32.totalorder %s19, %s22
    %p31 = scmp.eq.s32.totalorder %s14, 1
    %p32 = por %p30, %p31
    %p33 = scmp.ne.s32.totalorder %s22, %s23
    %p34 = scmp.eq.s32.totalorder %s14, 0
    %p35 = por %p33, %p34
    %p36 = scmp.ne.s32.totalorder %s22, %s23
    %p37 = scmp.eq.s32.totalorder %s15, 1
    %p38 = por %p36, %p37
    %p40 = scmp.ne.s32.totalorder %s23, %s39
    %p41 = scmp.eq.s32.totalorder %s15, 0
    %p42 = por %p40, %p41
    %s44 = sadd.s32 %s43, 1
    %p47 = scmp.eq.s32.totalorder %s9, 1
    %p48 = scmp.ne.s32.totalorder %s43, %s45
    %p49 = scmp.eq.s32.totalorder %s9, 0
    %p50 = por %p48, %p49
    %p51 = scmp.ne.s32.totalorder %s43, %s45
    %p52 = scmp.eq.s32.totalorder %s14, 1
    %p53 = por %p51, %p52
    %p54 = scmp.ne.s32.totalorder %s45, %s46
    %p55 = scmp.eq.s32.totalorder %s14, 0
    %p56 = por %p54, %p55
    %p57 = scmp.ne.s32.totalorder %s45, %s46
    %p58 = scmp.eq.s32.totalorder %s15, 1
    %p59 = por %p57, %p58
    %p61 = scmp.ne.s32.totalorder %s46, %s60
    %p62 = scmp.eq.s32.totalorder %s15, 0
    %p63 = por %p61, %p62
    %s65 = sadd.s32 %s64, 1
    %p68 = scmp.eq.s32.totalorder %s9, 1
    %p69 = scmp.ne.s32.totalorder %s64, %s66
    %p70 = scmp.eq.s32.totalorder %s9, 0
    %p71 = por %p69, %p70
    %p72 = scmp.ne.s32.totalorder %s64, %s66
    %p73 = scmp.eq.s32.totalorder %s14, 1
    %p74 = por %p72, %p73
    %p75 = scmp.ne.s32.totalorder %s66, %s67
    %p76 = scmp.eq.s32.totalorder %s14, 0
    %p77 = por %p75, %p76
    %p78 = scmp.ne.s32.totalorder %s66, %s67
    %p79 = scmp.eq.s32.totalorder %s15, 1
    %p80 = por %p78, %p79
    %p82 = scmp.ne.s32.totalorder %s67, %s81
    %p83 = scmp.eq.s32.totalorder %s15, 0
    %p84 = por %p82, %p83
    %s85 = ssub.s32 %s9, %s16
    %p86 = scmp.eq.s32.totalorder %s85, 0
    %s88 = sadd.s32 %s87, 1
    %s89 = scalar_select %p86, %s87, %s88
    %p92 = pneg %p86
    %p93 = scmp.eq.s32.totalorder %s9, 1
    %p94 = por %p92, %p93
    %p95 = scmp.ne.s32.totalorder %s87, %s90
    %p96 = scmp.eq.s32.totalorder %s9, 0
    %p97 = por %p95, %p96
    %p98 = scmp.ne.s32.totalorder %s87, %s90
    %p99 = scmp.eq.s32.totalorder %s14, 1
    %p100 = por %p98, %p99
    %p101 = scmp.ne.s32.totalorder %s90, %s91
    %p102 = scmp.eq.s32.totalorder %s14, 0
    %p103 = por %p101, %p102
    %p104 = scmp.ne.s32.totalorder %s90, %s91
    %p105 = scmp.eq.s32.totalorder %s15, 1
    %p106 = por %p104, %p105
    %p108 = scmp.ne.s32.totalorder %s91, %s107
    %p109 = scmp.eq.s32.totalorder %s15, 0
    %p110 = por %p108, %p109
    %p111 = scmp.le.s32.totalorder 1, %s9
    %p112 = scmp.lt.s32.totalorder %s9, 3
    %p113 = pnand %p111, %p112
    %p114 = pneg %p113
    // Predicated region
    $region9: #{tpu_custom_call.1} parent=5 // pred_check
      _
    $region10: #{tpu_custom_call.1} parent=5 // pred_check_branch
      %116 = sbr.rel (%p113) target = $region12
    $region11: #{tpu_custom_call.1} parent=5 // pred_region
      %s117 = ssub.s32 %s9, 1
      // Predicated region
      $region13: #{tpu_custom_call.1} parent=11 // pred_check
        %p118 = pneg %p56
      $region14: #{tpu_custom_call.1} parent=11 // pred_check_branch
        %120 = sbr.rel (%p118) target = $region16
      $region15: #{tpu_custom_call.1} parent=11 // pred_region
        _
      $region16: #{tpu_custom_call.1} parent=11 // pred_fallthru
        _
      // Predicated region
      $region17: #{tpu_custom_call.1} parent=11 // pred_check
        %p121 = pneg %p77
      $region18: #{tpu_custom_call.1} parent=11 // pred_check_branch
        %123 = sbr.rel (%p121) target = $region20
      $region19: #{tpu_custom_call.1} parent=11 // pred_region
        _
      $region20: #{tpu_custom_call.1} parent=11 // pred_fallthru
        _
    $region12: #{tpu_custom_call.1} parent=5 // pred_fallthru
      _
    %p124 = scmp.lt.s32.totalorder %s9, 2
    // Predicated region
    $region21: #{tpu_custom_call.1} parent=5 // pred_check
      %p125 = pneg %p124
    $region22: #{tpu_custom_call.1} parent=5 // pred_check_branch
      %127 = sbr.rel (%p125) target = $region24
    $region23: #{tpu_custom_call.1} parent=5 // pred_region
      // Predicated region
      $region25: #{tpu_custom_call.1} parent=23 // pred_check
        %p128 = pneg %p29
      $region26: #{tpu_custom_call.1} parent=23 // pred_check_branch
        %130 = sbr.rel (%p128) target = $region28
      $region27: #{tpu_custom_call.1} parent=23 // pred_region
        %s131 = smul.u32 5, %s9
        %p132 = scmp.lt.s32.totalorder %s131, 9
        %s133 = scalar_select %p132, %s131, 9
        %s134 = smul.addr %s133, 8
        %s135 = scalar_lea.vmem %s0, %s134
        %s136 = smul.u32 5, %s9
      $region28: #{tpu_custom_call.1} parent=23 // pred_fallthru
        _
    $region24: #{tpu_custom_call.1} parent=5 // pred_fallthru
      _
    %p137 = scmp.le.s32.totalorder 1, %s9
    %p138 = scmp.lt.s32.totalorder %s9, 3
    %p139 = pnand %p137, %p138
    %p140 = pneg %p139
    // Predicated region
    $region29: #{tpu_custom_call.1} parent=5 // pred_check
      _
    $region30: #{tpu_custom_call.1} parent=5 // pred_check_branch
      %142 = sbr.rel (%p139) target = $region32
    $region31: #{tpu_custom_call.1} parent=5 // pred_region
      %s143 = ssub.s32 %s9, 1
      %s144 = smul.u32 5, %s14
      %p145 = scmp.lt.s32.totalorder %s144, 9
      %s146 = scalar_select %p145, %s144, 9
      %s147 = smul.addr %s146, 8
      %s148 = scalar_lea.vmem %s0, %s147
      %p149 = pneg %p35
      %p150 = pneg %p32
      %p151 = pneg %p56
      %p152 = pneg %p53
      %p153 = pneg %p77
      %p154 = pneg %p74
      %p155 = pneg %p103
      %p156 = pneg %p100
      %s157 = smul.u32 5, %s14
      %p158 = scmp.lt.s32.totalorder %s157, 9
      %s159 = scalar_select %p158, %s157, 9
      %s160 = smul.addr %s159, 8
      %s161 = scalar_lea.vmem %s3, %s160
      %s162 = smul.u32 5, %s14
      %p163 = scmp.lt.s32.totalorder %s162, 9
      %s164 = scalar_select %p163, %s162, 9
      %s165 = smul.addr %s164, 8
      %s166 = scalar_lea.vmem %s0, %s165
      %s167 = smul.u32 5, %s14
      %s168 = smul.u32 5, %s14
      %p169 = scmp.lt.s32.totalorder %s168, 9
      %s170 = scalar_select %p169, %s168, 9
      %s171 = smul.addr %s170, 8
      %s172 = scalar_lea.vmem %s3, %s171
      %s173 = smul.u32 5, %s14
      %v174 = vld [vmem:[%s166] sm:$0xff]
      %v175 = vld [vmem:[%s166 + $0x8] sm:$0xff]
      %v176 = vld [vmem:[%s166 + $0x10] sm:$0xff]
      %v177 = vld [vmem:[%s166 + $0x18] sm:$0xff]
      %v178 = vld [vmem:[%s166 + $0x20] sm:$0xff]
      %v179 = vld [vmem:[%s1] sm:$0xff]
      %v180 = vld [vmem:[%s1 + $0x8] sm:$0xff]
      %v181 = vld [vmem:[%s1 + $0x10] sm:$0xff]
      %v182 = vld [vmem:[%s1 + $0x18] sm:$0xff]
      %v183 = vld [vmem:[%s1 + $0x20] sm:$0xff]
      %v184 = vld [vmem:[%s1 + $0x28] sm:$0xff]
      %v185 = vld [vmem:[%s1 + $0x30] sm:$0xff]
      %v186 = vld [vmem:[%s1 + $0x38] sm:$0xff]
      %vm187 = vcmask 523264
      %v189 = vsel %vm187, %v174, 0
      %v192 = vsel %vm187, %v175, 0
      %v195 = vsel %vm187, %v176, 0
      %v198 = vsel %vm187, %v177, 0
      %v201 = vsel %vm187, %v178, 0
      %203 = vmatprep.subr.mxu0 0.0
      %204 = vmatpush1.msra.mxu0 %v179
      %205 = vmatprep.subr.mxu0 0.0
      %206 = vmatpush1.msra.mxu0 %v180
      %207 = vmatprep.subr.mxu0 0.0
      %208 = vmatpush1.msra.mxu0 %v181
      %209 = vmatprep.subr.mxu0 0.0
      %210 = vmatpush1.msra.mxu0 %v182
      %211 = vmatprep.subr.mxu0 0.0
      %212 = vmatpush1.msra.mxu0 %v183
      %213 = vmatprep.subr.mxu0 0.0
      %214 = vmatpush1.msra.mxu0 %v184
      %215 = vmatprep.subr.mxu0 0.0
      %216 = vmatpush1.msra.mxu0 %v185
      %217 = vmatprep.subr.mxu0 0.0
      %218 = vmatpush1.msra.mxu0 %v186
      %219 = vmatprep.subr.mxu0 0.0
      %220 = vmatpush1.msra.mxu0 0.0
      %221 = vmatprep.subr.mxu0 0.0
      %222 = vmatpush1.msra.mxu0 0.0
      %223 = vmatprep.subr.mxu0 0.0
      %224 = vmatpush1.msra.mxu0 0.0
      %225 = vmatprep.subr.mxu0 0.0
      %226 = vmatpush1.msra.mxu0 0.0
      %227 = vmatprep.subr.mxu0 0.0
      %228 = vmatpush1.msra.mxu0 0.0
      %229 = vmatprep.subr.mxu0 0.0
      %230 = vmatpush1.msra.mxu0 0.0
      %231 = vmatprep.subr.mxu0 0.0
      %232 = vmatpush1.msra.mxu0 0.0
      %233 = vmatprep.subr.mxu0 0.0
      %234 = vmatpush1.msra.mxu0 0.0
      %235 = vmatprep.subr.mxu0 0.0
      %236 = vmatpush1.msra.mxu0 0.0
      %237 = vmatprep.subr.mxu0 0.0
      %238 = vmatpush1.msra.mxu0 0.0
      %239 = vmatprep.subr.mxu0 0.0
      %240 = vmatpush1.msra.mxu0 0.0
      %241 = vmatprep.subr.mxu0 0.0
      %242 = vmatpush1.msra.mxu0 0.0
      %243 = vmatprep.subr.mxu0 0.0
      %244 = vmatpush1.msra.mxu0 0.0
      %245 = vmatprep.subr.mxu0 0.0
      %246 = vmatpush1.msra.mxu0 0.0
      %247 = vmatprep.subr.mxu0 0.0
      %248 = vmatpush1.msra.mxu0 0.0
      %249 = vmatprep.subr.mxu0 0.0
      %250 = vmatpush1.msra.mxu0 0.0
      %251 = vmatprep.subr.mxu0 0.0
      %252 = vmatpush1.msra.mxu0 0.0
      %253 = vmatprep.subr.mxu0 0.0
      %254 = vmatpush1.msra.mxu0 0.0
      %255 = vmatprep.subr.mxu0 0.0
      %256 = vmatpush1.msra.mxu0 0.0
      %257 = vmatprep.subr.mxu0 0.0
      %258 = vmatpush1.msra.mxu0 0.0
      %259 = vmatprep.subr.mxu0 0.0
      %260 = vmatpush1.msra.mxu0 0.0
      %261 = vmatprep.subr.mxu0 0.0
      %262 = vmatpush1.msra.mxu0 0.0
      %263 = vmatprep.subr.mxu0 0.0
      %264 = vmatpush1.msra.mxu0 0.0
      %265 = vmatprep.subr.mxu0 0.0
      %266 = vmatpush1.msra.mxu0 0.0
      %267 = vmatprep.mubr.f32.mxu0 0.0
      %268 = vmatmul.mubr.f32.gmra.mrb[0].mxu0 %v189
      %v269 = vpop.f32.mrb[0].mxu0
      %v270 = vadd.f32 0.0, %v269
      %v271 = vpop.f32.mrb[0].mxu0
      %272 = vmatprep.mubr.f32.mxu0 0.0
      %273 = vmatmul.mubr.f32.gmra.mrb[0].mxu0 %v192
      %v274 = vpop.f32.mrb[0].mxu0
      %v275 = vadd.f32 0.0, %v274
      %v276 = vpop.f32.mrb[0].mxu0
      %277 = vmatprep.mubr.f32.mxu0 0.0
      %278 = vmatmul.mubr.f32.gmra.mrb[0].mxu0 %v195
      %v279 = vpop.f32.mrb[0].mxu0
      %v280 = vadd.f32 0.0, %v279
      %v281 = vpop.f32.mrb[0].mxu0
      %282 = vmatprep.mubr.f32.mxu0 0.0
      %283 = vmatmul.mubr.f32.gmra.mrb[0].mxu0 %v198
      %v284 = vpop.f32.mrb[0].mxu0
      %v285 = vadd.f32 0.0, %v284
      %v286 = vpop.f32.mrb[0].mxu0
      %287 = vmatprep.mubr.f32.mxu0 0.0
      %288 = vmatmul.mubr.f32.gmra.mrb[0].mxu0 %v201
      %v289 = vpop.f32.mrb[0].mxu0
      %v290 = vadd.f32 0.0, %v289
      %v291 = vpop.f32.mrb[0].mxu0
      %292 = vdwg.mxu0
      %v293 = vmul.f32 %v270, %v270
      %v294 = vmul.f32 %v275, %v275
      %v295 = vmul.f32 %v280, %v280
      %v296 = vmul.f32 %v285, %v285
      %v297 = vmul.f32 %v290, %v290
      %v298 = vld [vmem:[%s2] sm:$0xff]
      %v299 = vld [vmem:[%s2 + $0x8] sm:$0xff]
      %v300 = vld [vmem:[%s2 + $0x10] sm:$0xff]
      %v301 = vld [vmem:[%s2 + $0x18] sm:$0xff]
      %v302 = vld [vmem:[%s2 + $0x20] sm:$0xff]
      %v303 = vld [vmem:[%s2 + $0x28] sm:$0xff]
      %v304 = vld [vmem:[%s2 + $0x30] sm:$0xff]
      %v305 = vld [vmem:[%s2 + $0x38] sm:$0xff]
      %v306 = vld [vmem:[%s2 + $0x40] sm:$0xff]
      %v307 = vld [vmem:[%s2 + $0x48] sm:$0xff]
      %v308 = vld [vmem:[%s2 + $0x50] sm:$0xff]
      %v309 = vld [vmem:[%s2 + $0x58] sm:$0xff]
      %v310 = vld [vmem:[%s2 + $0x60] sm:$0xff]
      %v311 = vld [vmem:[%s2 + $0x68] sm:$0xff]
      %v312 = vld [vmem:[%s2 + $0x70] sm:$0xff]
      %v313 = vld [vmem:[%s2 + $0x78] sm:$0xff]
      %314 = vmatprep.subr.mxu0 0.0
      %315 = vmatpush1.msra.mxu0 %v298
      %316 = vmatprep.subr.mxu0 0.0
      %317 = vmatpush1.msra.mxu0 %v299
      %318 = vmatprep.subr.mxu0 0.0
      %319 = vmatpush1.msra.mxu0 %v300
      %320 = vmatprep.subr.mxu0 0.0
      %321 = vmatpush1.msra.mxu0 %v301
      %322 = vmatprep.subr.mxu0 0.0
      %323 = vmatpush1.msra.mxu0 %v302
      %324 = vmatprep.subr.mxu0 0.0
      %325 = vmatpush1.msra.mxu0 %v303
      %326 = vmatprep.subr.mxu0 0.0
      %327 = vmatpush1.msra.mxu0 %v304
      %328 = vmatprep.subr.mxu0 0.0
      %329 = vmatpush1.msra.mxu0 %v305
      %330 = vmatprep.subr.mxu0 0.0
      %331 = vmatpush1.msra.mxu0 %v306
      %332 = vmatprep.subr.mxu0 0.0
      %333 = vmatpush1.msra.mxu0 %v307
      %334 = vmatprep.subr.mxu0 0.0
      %335 = vmatpush1.msra.mxu0 %v308
      %336 = vmatprep.subr.mxu0 0.0
      %337 = vmatpush1.msra.mxu0 %v309
      %338 = vmatprep.subr.mxu0 0.0
      %339 = vmatpush1.msra.mxu0 %v310
      %340 = vmatprep.subr.mxu0 0.0
      %341 = vmatpush1.msra.mxu0 %v311
      %342 = vmatprep.subr.mxu0 0.0
      %343 = vmatpush1.msra.mxu0 %v312
      %344 = vmatprep.subr.mxu0 0.0
      %345 = vmatpush1.msra.mxu0 %v313
      %346 = vmatprep.subr.mxu0 0.0
      %347 = vmatpush1.msra.mxu0 0.0
      %348 = vmatprep.subr.mxu0 0.0
      %349 = vmatpush1.msra.mxu0 0.0
      %350 = vmatprep.subr.mxu0 0.0
      %351 = vmatpush1.msra.mxu0 0.0
      %352 = vmatprep.subr.mxu0 0.0
      %353 = vmatpush1.msra.mxu0 0.0
      %354 = vmatprep.subr.mxu0 0.0
      %355 = vmatpush1.msra.mxu0 0.0
      %356 = vmatprep.subr.mxu0 0.0
      %357 = vmatpush1.msra.mxu0 0.0
      %358 = vmatprep.subr.mxu0 0.0
      %359 = vmatpush1.msra.mxu0 0.0
      %360 = vmatprep.subr.mxu0 0.0
      %361 = vmatpush1.msra.mxu0 0.0
      %362 = vmatprep.subr.mxu0 0.0
      %363 = vmatpush1.msra.mxu0 0.0
      %364 = vmatprep.subr.mxu0 0.0
      %365 = vmatpush1.msra.mxu0 0.0
      %366 = vmatprep.subr.mxu0 0.0
      %367 = vmatpush1.msra.mxu0 0.0
      %368 = vmatprep.subr.mxu0 0.0
      %369 = vmatpush1.msra.mxu0 0.0
      %370 = vmatprep.subr.mxu0 0.0
      %371 = vmatpush1.msra.mxu0 0.0
      %372 = vmatprep.subr.mxu0 0.0
      %373 = vmatpush1.msra.mxu0 0.0
      %374 = vmatprep.subr.mxu0 0.0
      %375 = vmatpush1.msra.mxu0 0.0
      %376 = vmatprep.subr.mxu0 0.0
      %377 = vmatpush1.msra.mxu0 0.0
      %378 = vmatprep.mubr.f32.mxu0 0.0
      %379 = vmatmul.mubr.f32.gmra.mrb[0].mxu0 %v293
      %v380 = vpop.f32.mrb[0].mxu0
      %v381 = vadd.f32 0.0, %v380
      %v382 = vpop.f32.mrb[0].mxu0
      %383 = vmatprep.mubr.f32.mxu0 0.0
      %384 = vmatmul.mubr.f32.gmra.mrb[0].mxu0 %v294
      %v385 = vpop.f32.mrb[0].mxu0
      %v386 = vadd.f32 0.0, %v385
      %v387 = vpop.f32.mrb[0].mxu0
      %388 = vmatprep.mubr.f32.mxu0 0.0
      %389 = vmatmul.mubr.f32.gmra.mrb[0].mxu0 %v295
      %v390 = vpop.f32.mrb[0].mxu0
      %v391 = vadd.f32 0.0, %v390
      %v392 = vpop.f32.mrb[0].mxu0
      %393 = vmatprep.mubr.f32.mxu0 0.0
      %394 = vmatmul.mubr.f32.gmra.mrb[0].mxu0 %v296
      %v395 = vpop.f32.mrb[0].mxu0
      %v396 = vadd.f32 0.0, %v395
      %v397 = vpop.f32.mrb[0].mxu0
      %398 = vmatprep.mubr.f32.mxu0 0.0
      %399 = vmatmul.mubr.f32.gmra.mrb[0].mxu0 %v297
      %v400 = vpop.f32.mrb[0].mxu0
      %v401 = vadd.f32 0.0, %v400
      %v402 = vpop.f32.mrb[0].mxu0
      %403 = vdwg.mxu0
      %v404 = vmax.f32 %v381, 1e-10
      %v405 = vmax.f32 %v386, 1e-10
      %v406 = vmax.f32 %v391, 1e-10
      %v407 = vmax.f32 %v396, 1e-10
      %v408 = vmax.f32 %v401, 1e-10
      %v409 = vlog2.pop %v404
      %v410 = vmul.f32 %v409, 0.6931472
      %v411 = vlog2.pop %v405
      %v412 = vmul.f32 %v411, 0.6931472
      %v413 = vlog2.pop %v406
      %v414 = vmul.f32 %v413, 0.6931472
      %v415 = vlog2.pop %v407
      %v416 = vmul.f32 %v415, 0.6931472
      %v417 = vlog2.pop %v408
      %v418 = vmul.f32 %v417, 0.6931472
      %v419 = vmul.f32 %v410, 0.4342945
      %v420 = vmul.f32 %v412, 0.4342945
      %v421 = vmul.f32 %v414, 0.4342945
      %v422 = vmul.f32 %v416, 0.4342945
      %v423 = vmul.f32 %v418, 0.4342945
      %v424 = vmul.f32 %v419, 10.0
      %v425 = vmul.f32 %v420, 10.0
      %v426 = vmul.f32 %v421, 10.0
      %v427 = vmul.f32 %v422, 10.0
      %v428 = vmul.f32 %v423, 10.0
      %vm429 = vcmask 130048
      %430 = vst.msk [vmem:[%s172] sm:$0xff] %vm429, %v424
      %431 = vst.msk [vmem:[%s172 + $0x8] sm:$0xff] %vm429, %v425
      %432 = vst.msk [vmem:[%s172 + $0x10] sm:$0xff] %vm429, %v426
      %433 = vst.msk [vmem:[%s172 + $0x18] sm:$0xff] %vm429, %v427
      %434 = vst.msk [vmem:[%s172 + $0x20] sm:$0xff] %vm429, %v428
      %s435 = smul.u32 5, %s14
      %p436 = scmp.lt.s32.totalorder %s435, 9
      %s437 = scalar_select %p436, %s435, 9
      %s438 = smul.addr %s437, 8
      %s439 = scalar_lea.vmem %s3, %s438
      // Predicated region
      $region33: #{tpu_custom_call.1} parent=31 // pred_check
        %p440 = pneg %p100
      $region34: #{tpu_custom_call.1} parent=31 // pred_check_branch
        %442 = sbr.rel (%p440) target = $region36
      $region35: #{tpu_custom_call.1} parent=31 // pred_region
        %s443 = smul.u32 5, %s14
      $region36: #{tpu_custom_call.1} parent=31 // pred_fallthru
        _
    $region32: #{tpu_custom_call.1} parent=5 // pred_fallthru
      _
    %p444 = scmp.le.s32.totalorder 2, %s9
    // Predicated region
    $region37: #{tpu_custom_call.1} parent=5 // pred_check
      %p445 = pneg %p444
    $region38: #{tpu_custom_call.1} parent=5 // pred_check_branch
      %447 = sbr.rel (%p445) target = $region40
    $region39: #{tpu_custom_call.1} parent=5 // pred_region
      %s448 = ssub.s32 %s9, 2
      // Predicated region
      $region41: #{tpu_custom_call.1} parent=39 // pred_check
        %p449 = pneg %p106
      $region42: #{tpu_custom_call.1} parent=39 // pred_check_branch
        %451 = sbr.rel (%p449) target = $region44
      $region43: #{tpu_custom_call.1} parent=39 // pred_region
        %s452 = smul.u32 5, %s15
        %p453 = scmp.lt.s32.totalorder %s452, 9
        %s454 = scalar_select %p453, %s452, 9
        %s455 = smul.addr %s454, 8
        %s456 = scalar_lea.vmem %s3, %s455
      $region44: #{tpu_custom_call.1} parent=39 // pred_fallthru
        _
    $region40: #{tpu_custom_call.1} parent=5 // pred_fallthru
      _
  $region6: #{tpu_custom_call.1} parent=0 // loop_footer
    %s13 = sadd.s32 1, %s9
  $region7: #{tpu_custom_call.1} parent=0 // loop_footer_branch
    %8 = sbr.rel target = $region3
  $region8: #{tpu_custom_call.1} parent=0 // loop_exit
    _

</llo_original>
